<compile_context>
chip_gen: v5e
topology: v5e:2x2
jax: 0.10.0
libtpu: 0.0.40
codegen_flags: <defaults>
</compile_context>

<pallas_src>
import jax
import jax.numpy as jnp
from jax.experimental import pallas as pl
from jax.experimental.pallas import tpu as pltpu


def _round_up(v, m):
    return ((v + m - 1) // m) * m


def _pad_cast(a, shape, dtype):
    """Cast and zero-pad `a` up to `shape`; the pad op is skipped when aligned."""
    a = a.astype(dtype)
    pads = [(0, t - s) for s, t in zip(a.shape, shape)]
    if any(hi for _, hi in pads):
        a = jnp.pad(a, pads)
    return a


def _vmem_budget_bytes():
    # ~96 MiB on v5e/v6e (128 MiB physical VMEM), ~48 MiB on v7x (64 MiB).
    try:
        cap = int(pltpu.get_tpu_info().vmem_capacity_bytes)
    except Exception:
        cap = 64 * 1024 * 1024
    return max(32 * 1024 * 1024, min(cap * 3 // 4, 100 * 1024 * 1024))


# ---------------------------------------------------------------------------
# Kernel 1: support = x @ W^T + b   (row-tiled dense linear, bf16 output)
# ---------------------------------------------------------------------------
def _support_kernel(x_ref, wt_ref, b_ref, sup_ref):
    sup = jnp.dot(x_ref[...], wt_ref[...], preferred_element_type=jnp.float32)
    sup_ref[...] = (sup + b_ref[...]).astype(sup_ref.dtype)


# ---------------------------------------------------------------------------
# Kernel 2: out = relu(adj @ support)  (batched, row- and K-tiled, f32 acc)
# ---------------------------------------------------------------------------
def _aggregate_kernel(adj_ref, sup_ref, out_ref, acc_ref):
    k = pl.program_id(2)

    @pl.when(k == 0)
    def _():
        acc_ref[...] = jnp.zeros_like(acc_ref)

    acc_ref[...] += jnp.einsum(
        "bij,bjo->bio", adj_ref[...], sup_ref[...],
        preferred_element_type=jnp.float32)

    @pl.when(k == pl.num_programs(2) - 1)
    def _():
        out_ref[...] = jnp.maximum(acc_ref[...], 0.0).astype(out_ref.dtype)


def graph_conv_layer(x, adj, weight, bias=None, *, stream_dtype=jnp.bfloat16):
    """GCN layer: relu(adj @ (x @ W.T + b)).

    x:      [N, F_in]  or  [B, N, F_in]
    adj:    [N, N]     or  [B, N, N]
    weight: [F_out, F_in]   (PyTorch nn.Linear convention)
    bias:   [F_out] or None
    stream_dtype: dtype used to stream adj / support through HBM (bf16 default).
    """
    single = (x.ndim == 2)
    if single:
        x, adj = x[None], adj[None]

    B, N, f_in = x.shape
    f_out = weight.shape[0]
    if bias is None:
        bias = jnp.zeros((f_out,), weight.dtype)
    out_dtype = jnp.result_type(x.dtype, weight.dtype)

    budget = _vmem_budget_bytes()
    big_vmem = budget >= 96 * 1024 * 1024      # v5e / v6e
    row_tile = 1024 if big_vmem else 512       # adjacency rows per step
    k_tile = 1024 if big_vmem else 512         # adjacency cols (K) per step
    k_split_threshold = 2 * k_tile             # only K-tile when N is large

    fi_p = _round_up(f_in, 128)
    fo_p = _round_up(f_out, 128)

    # ---- adjacency tiling: tm x tk tiles of the padded N x N matrix ----
    n8 = _round_up(max(N, 8), 8)
    if n8 > k_split_threshold:
        # Large graphs: square tiles + K accumulation -> per-step VMEM is
        # independent of N (fits v7x's 64 MiB VMEM regardless of graph size).
        n_k = int(pl.cdiv(n8, k_tile))
        tk = _round_up(int(pl.cdiv(n8, n_k)), 128)
        n_p = tk * n_k
        tm, n_row = tk, n_k
    elif n8 > row_tile:
        n_row = int(pl.cdiv(n8, row_tile))
        tm = _round_up(int(pl.cdiv(n8, n_row)), 8)
        n_p = tm * n_row
        tk, n_k = n_p, 1
    else:
        n_p = n8
        tm, tk, n_row, n_k = n_p, n_p, 1, 1

    # ---- batch tiling: several graphs per step to amortize step overhead ----
    Bt = max(1, min(B, 2048 // n_p))
    if n_row == 1 and B > 1:
        Bt = min(Bt, max(1, B // 2))   # keep >= 2 parallel steps for megacore
    Bp = _round_up(B, Bt)
    n_b = Bp // Bt

    # ---- pad / cast operands (no-ops when already aligned) ----
    f32 = jnp.float32
    x_p = _pad_cast(x, (Bp, n_p, fi_p), f32)
    adj_p = _pad_cast(adj, (Bp, n_p, n_p), stream_dtype)   # 0/1 exact in bf16
    wt_p = _pad_cast(weight.T, (fi_p, fo_p), f32)          # pre-transposed once
    b_p = _pad_cast(bias.reshape(1, -1), (1, fo_p), f32)

    vmem = int(budget)

    # ---- kernel 1: support = x @ W^T + b (flattened rows, lane-dense) ----
    tm1 = Bt * tm
    x_flat = x_p.reshape(Bp * n_p, fi_p)       # contiguous reshape (free)
    sup_flat = pl.pallas_call(
        _support_kernel,
        out_shape=jax.ShapeDtypeStruct((Bp * n_p, fo_p), stream_dtype),
        grid=(n_b * n_row,),
        in_specs=[
            pl.BlockSpec((tm1, fi_p), lambda i: (i, 0)),
            pl.BlockSpec((fi_p, fo_p), lambda i: (0, 0)),
            pl.BlockSpec((1, fo_p), lambda i: (0, 0)),
        ],
        out_specs=pl.BlockSpec((tm1, fo_p), lambda i: (i, 0)),
        compiler_params=pltpu.CompilerParams(
            dimension_semantics=("parallel",),
            vmem_limit_bytes=vmem),
    )(x_flat, wt_p, b_p)
    sup = sup_flat.reshape(Bp, n_p, fo_p)

    # ---- kernel 2: out = relu(adj @ support) ----
    out_p = pl.pallas_call(
        _aggregate_kernel,
        out_shape=jax.ShapeDtypeStruct((Bp, n_p, fo_p), out_dtype),
        grid=(n_b, n_row, n_k),
        in_specs=[
            pl.BlockSpec((Bt, tm, tk), lambda b, r, k: (b, r, k)),
            pl.BlockSpec((Bt, tk, fo_p), lambda b, r, k: (b, k, 0)),
        ],
        out_specs=pl.BlockSpec((Bt, tm, fo_p), lambda b, r, k: (b, r, 0)),
        scratch_shapes=[pltpu.VMEM((Bt, tm, fo_p), jnp.float32)],
        compiler_params=pltpu.CompilerParams(
            dimension_semantics=("parallel", "parallel", "arbitrary"),
            vmem_limit_bytes=vmem),
    )(adj_p, sup)

    out = out_p[:B, :N, :f_out]
    return out[0] if single else out


if __name__ == "__main__":
    key = jax.random.PRNGKey(0)
    k_x, k_adj, k_w, k_b = jax.random.split(key, 4)

    B, N, F_IN, F_OUT = 8, 16, 32, 32   # batch of 8 small graphs, 32->32 feats

    x = jax.random.normal(k_x, (B, N, F_IN), dtype=jnp.float32)

    # symmetric 0/1 adjacency with self-loops (deterministic)
    a = (jax.random.uniform(k_adj, (B, N, N)) > 0.7).astype(jnp.float32)
    eye = jnp.eye(N, dtype=jnp.float32)[None]
    adj = jnp.clip(a + jnp.swapaxes(a, -1, -2) + eye, 0.0, 1.0)

    # nn.Linear-style deterministic init: U(-1/sqrt(F_IN), 1/sqrt(F_IN))
    bound = 1.0 / (F_IN ** 0.5)
    weight = jax.random.uniform(k_w, (F_OUT, F_IN), minval=-bound, maxval=bound,
                                dtype=jnp.float32)
    bias = jax.random.uniform(k_b, (F_OUT,), minval=-bound, maxval=bound,
                              dtype=jnp.float32)

    # references
    sup_f32 = jnp.einsum("bnf,of->bno", x, weight) + bias
    ref = jnp.maximum(jnp.einsum("bij,bjo->bio", adj, sup_f32), 0.0)
    sup_bf = sup_f32.astype(jnp.bfloat16).astype(jnp.float32)
    ref_bf = jnp.maximum(jnp.einsum("bij,bjo->bio", adj, sup_bf), 0.0)

    # default (bf16-streamed) path
    out = graph_conv_layer(x, adj, weight, bias)
    jax.block_until_ready(out)
    assert out.shape == (B, N, F_OUT)
    assert jnp.allclose(out, ref_bf, atol=1e-3, rtol=1e-3), "bf16 path mismatch"
    assert jnp.allclose(out, ref, atol=1e-1, rtol=5e-2), "bf16 path too far from f32 ref"

    # exact f32-streamed path
    out_f32 = graph_conv_layer(x, adj, weight, bias, stream_dtype=jnp.float32)
    jax.block_until_ready(out_f32)
    assert jnp.allclose(out_f32, ref, atol=1e-4, rtol=1e-4), "f32 path mismatch"

    # single-graph path (matches the PyTorch module forward exactly)
    out1 = graph_conv_layer(x[0], adj[0], weight, bias)
    jax.block_until_ready(out1)
    ref1 = jnp.maximum(adj[0] @ sup_bf[0], 0.0)
    assert out1.shape == (N, F_OUT)
    assert jnp.allclose(out1, ref1, atol=1e-3, rtol=1e-3), "single mismatch"

    print("KERNEL_OK")
</pallas_src>

<mosaic_0001>
module attributes {stable_mosaic.version = 11 : i64} {
  func.func @_support_kernel(%arg0: i32, %arg1: memref<64x128xf32, #tpu.memory_space<vmem>>, %arg2: memref<128x128xf32, #tpu.memory_space<vmem>>, %arg3: memref<1x128xf32, #tpu.memory_space<vmem>>, %arg4: memref<64x128xbf16, #tpu.memory_space<vmem>>) attributes {dimension_semantics = [#tpu.dimension_semantics<parallel>], iteration_bounds = array<i64: 2>, scalar_prefetch = 0 : i64, scratch_operands = 0 : i64, tpu.core_type = #tpu.core_type<tc>, window_params = [{transform_indices = @transform_0, window_bounds = array<i64: 64, 128>}, {pipeline_mode = #tpu.pipeline_mode<synchronous>, transform_indices = @transform_1, window_bounds = array<i64: 128, 128>}, {pipeline_mode = #tpu.pipeline_mode<synchronous>, transform_indices = @transform_2, window_bounds = array<i64: 1, 128>}, {transform_indices = @transform_3, window_bounds = array<i64: 64, 128>}]} {
    %c0 = arith.constant 0 : index
    %c0_0 = arith.constant 0 : index
    %0 = vector.load %arg1[%c0, %c0_0] : memref<64x128xf32, #tpu.memory_space<vmem>>, vector<64x128xf32>
    %c0_1 = arith.constant 0 : index
    %c0_2 = arith.constant 0 : index
    %1 = vector.load %arg2[%c0_1, %c0_2] : memref<128x128xf32, #tpu.memory_space<vmem>>, vector<128x128xf32>
    %cst = arith.constant dense<0.000000e+00> : vector<64x128xf32>
    %2 = tpu.matmul %0, %1, %cst {dimension_numbers = #tpu.dot_dimension_numbers<[1], [0], [0], [1], [0, 0, 1, 1], [], []>} : vector<64x128xf32>, vector<128x128xf32>, vector<64x128xf32> -> vector<64x128xf32>
    %c0_3 = arith.constant 0 : index
    %c0_4 = arith.constant 0 : index
    %3 = vector.load %arg3[%c0_3, %c0_4] : memref<1x128xf32, #tpu.memory_space<vmem>>, vector<1x128xf32>
    %4 = vector.broadcast %3 : vector<1x128xf32> to vector<64x128xf32>
    %5 = arith.addf %2, %4 : vector<64x128xf32>
    %6 = arith.truncf %5 : vector<64x128xf32> to vector<64x128xbf16>
    %c0_5 = arith.constant 0 : index
    %c0_6 = arith.constant 0 : index
    %7 = vector.load %arg4[%c0_5, %c0_6] : memref<64x128xbf16, #tpu.memory_space<vmem>>, vector<64x128xbf16>
    tpu.vector_store %arg4[%c0_5, %c0_6], %6 {strides = array<i32>} : memref<64x128xbf16, #tpu.memory_space<vmem>>, vector<64x128xbf16>,
    return
  }
  func.func @transform_0(%arg0: i32) -> (i32, i32) {
    %c0_i32 = arith.constant 0 : i32
    %c0_i32_0 = arith.constant 0 : i32
    return %arg0, %c0_i32 : i32, i32
  }
  func.func @transform_1(%arg0: i32) -> (i32, i32) {
    %c0_i32 = arith.constant 0 : i32
    %c0_i32_0 = arith.constant 0 : i32
    %c0_i32_1 = arith.constant 0 : i32
    return %c0_i32, %c0_i32_0 : i32, i32
  }
  func.func @transform_2(%arg0: i32) -> (i32, i32) {
    %c0_i32 = arith.constant 0 : i32
    %c0_i32_0 = arith.constant 0 : i32
    %c0_i32_1 = arith.constant 0 : i32
    return %c0_i32, %c0_i32_0 : i32, i32
  }
  func.func @transform_3(%arg0: i32) -> (i32, i32) {
    %c0_i32 = arith.constant 0 : i32
    %c0_i32_0 = arith.constant 0 : i32
    return %arg0, %c0_i32 : i32, i32
  }
}

</mosaic_0001>

<llo_original>
// kernel: tpu_custom_call.1
$region0: #{tpu_custom_call.1}
  #allocation0 [shape = 'u32[]', space=smem, size = 0x4, offset = 0x4, fixed_abs, tag = 'smem constant byte address 0x4 - core index']
  #allocation1 [shape = 'u32[72,128]{1,0:T(1,128)}', space=vmem, size = 0x9000, scoped, tag = 'internal scratch']
  %s0 = inlined_call_operand.hbm [shape: f32[128,128], index: 0, kind: input, shape index: {}]
  %s1 = inlined_call_operand.hbm [shape: f32[128,128], index: 1, kind: input, shape index: {}]
  %s2 = inlined_call_operand.vmem [shape: f32[1,128], index: 2, kind: input, shape index: {}]
  %s3 = inlined_call_operand.hbm [shape: bf16[128,128], index: 3, kind: output, shape index: {}]
  %s4 = sld [smem:[#allocation0]]
  $region53: #{tpu_custom_call.1} parent=0
    _
  %s6 = ssub.s32 1, %s4
  %s7 = scalar_select 0, %s6, %s4
  $region1: #{tpu_custom_call.1} parent=0
    #allocation2 [shape = 'u8[65536]{0}', space=vmem, size = 0x10000, scoped, tag = 'input window, operand 0']
    #allocation3 [shape = 's32[2]{0}', space=sflag, size = 0x8, scoped, tag = 'scoped memory for tpu_custom_call.1']
    #allocation4 [shape = 's32[2]{0}', space=sflag, size = 0x8, scoped, tag = 'scoped memory for tpu_custom_call.1']
    #allocation5 [shape = 'u8[65536]{0}', space=vmem, size = 0x10000, scoped, tag = 'input window, operand 1, single buffered']
    #allocation6 [shape = 's32[1]{0}', space=sflag, size = 0x4, scoped, tag = 'scoped memory for tpu_custom_call.1']
    #allocation7 [shape = 'u8[32768]{0}', space=vmem, size = 0x8000, scoped, tag = 'output window, operand 0']
    %8 = vsyncpa [#allocation3], 0
    %s9 = scalar_lea.sflag [#allocation3], 1
    %10 = vsyncpa %s9, 0
    %11 = vsyncpa [#allocation6], 0
    %12 = vsyncpa [#allocation4], 0
    %s13 = scalar_lea.sflag [#allocation4], 1
    %14 = vsyncpa %s13, 0
    loop: start=0, step=1, limit=4
    $region2: #{tpu_custom_call.1} parent=1 // loop_pre_header
      _
    $region3: #{tpu_custom_call.1} parent=1 // loop_header
      %s16 = sphi 0, %s20
      %p17 = scmp.ge.s32.totalorder %s16, 4
      %s26 = sphi 0, %s28
      %s29 = sphi 0, %s26
      %s30 = sphi 0, %s29
      %s46 = sphi 0, %s30
      %s50 = sphi 0, %s50
      %s52 = sphi 0, %s50
      %s53 = sphi 0, %s52
      %s67 = sphi 0, %s53
      %s71 = sphi 0, %s71
      %s73 = sphi 0, %s71
      %s74 = sphi 0, %s73
      %s88 = sphi 0, %s74
      %s94 = sphi 0, %s96
      %s97 = sphi 0, %s94
      %s98 = sphi 0, %s97
      %s114 = sphi 0, %s98
    $region4: #{tpu_custom_call.1} parent=1 // loop_header_branch
      %19 = sbr.rel (%p17) target = $region8
    $region5: #{tpu_custom_call.1} parent=1 // loop_body
      %s21 = ssub.s32 %s16, 1
      %s22 = ssub.s32 %s16, 2
      %s23 = sadd.s32 %s16, 1
      %s24 = ssub.s32 %s16, %s23
      %p25 = scmp.eq.s32.totalorder %s24, 0
      %s27 = sadd.s32 %s26, 1
      %s28 = scalar_select %p25, %s26, %s27
      %p31 = pneg %p25
      %p32 = scmp.eq.s32.totalorder %s16, 1
      %p33 = por %p31, %p32
      %p34 = scmp.ne.s32.totalorder %s26, %s29
      %p35 = scmp.eq.s32.totalorder %s16, 0
      %p36 = por %p34, %p35
      %p37 = scmp.ne.s32.totalorder %s26, %s29
      %p38 = scmp.eq.s32.totalorder %s21, 1
      %p39 = por %p37, %p38
      %p40 = scmp.ne.s32.totalorder %s29, %s30
      %p41 = scmp.eq.s32.totalorder %s21, 0
      %p42 = por %p40, %p41
      %p43 = scmp.ne.s32.totalorder %s29, %s30
      %p44 = scmp.eq.s32.totalorder %s22, 1
      %p45 = por %p43, %p44
      %p47 = scmp.ne.s32.totalorder %s30, %s46
      %p48 = scmp.eq.s32.totalorder %s22, 0
      %p49 = por %p47, %p48
      %s51 = sadd.s32 %s50, 1
      %p54 = scmp.eq.s32.totalorder %s16, 1
      %p55 = scmp.ne.s32.totalorder %s50, %s52
      %p56 = scmp.eq.s32.totalorder %s16, 0
      %p57 = por %p55, %p56
      %p58 = scmp.ne.s32.totalorder %s50, %s52
      %p59 = scmp.eq.s32.totalorder %s21, 1
      %p60 = por %p58, %p59
      %p61 = scmp.ne.s32.totalorder %s52, %s53
      %p62 = scmp.eq.s32.totalorder %s21, 0
      %p63 = por %p61, %p62
      %p64 = scmp.ne.s32.totalorder %s52, %s53
      %p65 = scmp.eq.s32.totalorder %s22, 1
      %p66 = por %p64, %p65
      %p68 = scmp.ne.s32.totalorder %s53, %s67
      %p69 = scmp.eq.s32.totalorder %s22, 0
      %p70 = por %p68, %p69
      %s72 = sadd.s32 %s71, 1
      %p75 = scmp.eq.s32.totalorder %s16, 1
      %p76 = scmp.ne.s32.totalorder %s71, %s73
      %p77 = scmp.eq.s32.totalorder %s16, 0
      %p78 = por %p76, %p77
      %p79 = scmp.ne.s32.totalorder %s71, %s73
      %p80 = scmp.eq.s32.totalorder %s21, 1
      %p81 = por %p79, %p80
      %p82 = scmp.ne.s32.totalorder %s73, %s74
      %p83 = scmp.eq.s32.totalorder %s21, 0
      %p84 = por %p82, %p83
      %p85 = scmp.ne.s32.totalorder %s73, %s74
      %p86 = scmp.eq.s32.totalorder %s22, 1
      %p87 = por %p85, %p86
      %p89 = scmp.ne.s32.totalorder %s74, %s88
      %p90 = scmp.eq.s32.totalorder %s22, 0
      %p91 = por %p89, %p90
      %s92 = ssub.s32 %s16, %s23
      %p93 = scmp.eq.s32.totalorder %s92, 0
      %s95 = sadd.s32 %s94, 1
      %s96 = scalar_select %p93, %s94, %s95
      %p99 = pneg %p93
      %p100 = scmp.eq.s32.totalorder %s16, 1
      %p101 = por %p99, %p100
      %p102 = scmp.ne.s32.totalorder %s94, %s97
      %p103 = scmp.eq.s32.totalorder %s16, 0
      %p104 = por %p102, %p103
      %p105 = scmp.ne.s32.totalorder %s94, %s97
      %p106 = scmp.eq.s32.totalorder %s21, 1
      %p107 = por %p105, %p106
      %p108 = scmp.ne.s32.totalorder %s97, %s98
      %p109 = scmp.eq.s32.totalorder %s21, 0
      %p110 = por %p108, %p109
      %p111 = scmp.ne.s32.totalorder %s97, %s98
      %p112 = scmp.eq.s32.totalorder %s22, 1
      %p113 = por %p111, %p112
      %p115 = scmp.ne.s32.totalorder %s98, %s114
      %p116 = scmp.eq.s32.totalorder %s22, 0
      %p117 = por %p115, %p116
      %p118 = scmp.le.s32.totalorder 1, %s16
      %p119 = scmp.lt.s32.totalorder %s16, 3
      %p120 = pnand %p118, %p119
      %p121 = pneg %p120
      // Predicated region
      $region9: #{tpu_custom_call.1} parent=5 // pred_check
        _
      $region10: #{tpu_custom_call.1} parent=5 // pred_check_branch
        %123 = sbr.rel (%p120) target = $region12
      $region11: #{tpu_custom_call.1} parent=5 // pred_region
        %s124 = ssub.s32 %s16, 1
        // Predicated region
        $region13: #{tpu_custom_call.1} parent=11 // pred_check
          %p125 = pneg %p63
        $region14: #{tpu_custom_call.1} parent=11 // pred_check_branch
          %127 = sbr.rel (%p125) target = $region16
        $region15: #{tpu_custom_call.1} parent=11 // pred_region
          %129 = vsyncadd [#allocation6], 0
          %s130 = sshll.u32 %s1, 4
          %s131 = int_to_ptr.hbm [resolvable:$true] %s130
          %s132 = sshll.u32 [#allocation5], 4
          %s133 = int_to_ptr.vmem [resolvable:$true] %s132
          %138 = dma.hbm_to_vmem [thread:$0]  %s131, 2048, %s133, [#allocation6], 128, 128, 8
        $region16: #{tpu_custom_call.1} parent=11 // pred_fallthru
          _
        // Predicated region
        $region17: #{tpu_custom_call.1} parent=11 // pred_check
          %p139 = pneg %p84
        $region18: #{tpu_custom_call.1} parent=11 // pred_check_branch
          %141 = sbr.rel (%p139) target = $region20
        $region19: #{tpu_custom_call.1} parent=11 // pred_region
          _
        $region20: #{tpu_custom_call.1} parent=11 // pred_fallthru
          _
      $region12: #{tpu_custom_call.1} parent=5 // pred_fallthru
        _
      %p142 = scmp.lt.s32.totalorder %s16, 2
      // Predicated region
      $region21: #{tpu_custom_call.1} parent=5 // pred_check
        %p143 = pneg %p142
      $region22: #{tpu_custom_call.1} parent=5 // pred_check_branch
        %145 = sbr.rel (%p143) target = $region24
      $region23: #{tpu_custom_call.1} parent=5 // pred_region
        // Predicated region
        $region25: #{tpu_custom_call.1} parent=23 // pred_check
          %p146 = pneg %p36
        $region26: #{tpu_custom_call.1} parent=23 // pred_check_branch
          %148 = sbr.rel (%p146) target = $region28
        $region27: #{tpu_custom_call.1} parent=23 // pred_region
          %s149 = sand.u32 %s26, 1
          %s150 = scalar_lea.sflag [#allocation3], %s149
          %s151 = sand.u32 %s26, 1
          %s152 = smul.addr %s151, 64
          %s153 = scalar_lea.vmem [#allocation2], %s152
          %s154 = smul.u32 8, %s16
          %156 = vsyncadd %s150, 0
          %s157 = smul.addr %s154, 8
          %s158 = scalar_lea.hbm %s0, %s157
          %s159 = sshll.u32 %s158, 4
          %s160 = int_to_ptr.hbm [resolvable:$true] %s159
          %s161 = sshll.u32 %s153, 4
          %s162 = int_to_ptr.vmem [resolvable:$true] %s161
          %167 = dma.hbm_to_vmem [thread:$0]  %s160, 1024, %s162, %s150, 128, 128, 8
        $region28: #{tpu_custom_call.1} parent=23 // pred_fallthru
          _
      $region24: #{tpu_custom_call.1} parent=5 // pred_fallthru
        _
      %p168 = scmp.le.s32.totalorder 1, %s16
      %p169 = scmp.lt.s32.totalorder %s16, 3
      %p170 = pnand %p168, %p169
      %p171 = pneg %p170
      // Predicated region
      $region29: #{tpu_custom_call.1} parent=5 // pred_check
        _
      $region30: #{tpu_custom_call.1} parent=5 // pred_check_branch
        %173 = sbr.rel (%p170) target = $region32
      $region31: #{tpu_custom_call.1} parent=5 // pred_region
        %s174 = ssub.s32 %s16, 1
        %s175 = sand.u32 %s29, 1
        %s176 = scalar_lea.sflag [#allocation3], %s175
        %s177 = sand.u32 %s29, 1
        %s178 = smul.addr %s177, 64
        %s179 = scalar_lea.vmem [#allocation2], %s178
        // Predicated region
        $region33: #{tpu_custom_call.1} parent=31 // pred_check
          %p180 = pneg %p42
        $region34: #{tpu_custom_call.1} parent=31 // pred_check_branch
          %182 = sbr.rel (%p180) target = $region36
        $region35: #{tpu_custom_call.1} parent=31 // pred_region
          %184 = dma.done %s176, 1024
        $region36: #{tpu_custom_call.1} parent=31 // pred_fallthru
          _
        // Predicated region
        $region37: #{tpu_custom_call.1} parent=31 // pred_check
          %p185 = pneg %p63
        $region38: #{tpu_custom_call.1} parent=31 // pred_check_branch
          %187 = sbr.rel (%p185) target = $region40
        $region39: #{tpu_custom_call.1} parent=31 // pred_region
          %189 = dma.done [#allocation6], 2048
        $region40: #{tpu_custom_call.1} parent=31 // pred_fallthru
          _
        %s190 = sand.u32 %s29, 1
        %s191 = scalar_lea.sflag [#allocation3], %s190
        %s192 = sand.u32 %s29, 1
        %s193 = smul.addr %s192, 64
        %s194 = scalar_lea.vmem [#allocation2], %s193
        %p195 = pneg %p42
        %p196 = pneg %p39
        %p197 = pneg %p63
        %p198 = pneg %p60
        %p199 = pneg %p84
        %p200 = pneg %p81
        %p201 = pneg %p110
        %p202 = pneg %p107
        %s203 = sand.u32 %s97, 1
        %s204 = scalar_lea.sflag [#allocation4], %s203
        %s205 = sand.u32 %s97, 1
        %s206 = smul.addr %s205, 32
        %s207 = scalar_lea.vmem [#allocation7], %s206
        %s208 = smul.u32 8, %s21
        %s209 = smul.u32 8, %s21
        %v210 = vld [vmem:[%s179] sm:$0xff]
        %v211 = vld [vmem:[%s179 + $0x8] sm:$0xff]
        %v212 = vld [vmem:[%s179 + $0x10] sm:$0xff]
        %v213 = vld [vmem:[%s179 + $0x18] sm:$0xff]
        %v214 = vld [vmem:[%s179 + $0x20] sm:$0xff]
        %v215 = vld [vmem:[%s179 + $0x28] sm:$0xff]
        %v216 = vld [vmem:[%s179 + $0x30] sm:$0xff]
        %v217 = vld [vmem:[%s179 + $0x38] sm:$0xff]
        %v218 = vld [vmem:[#allocation5] sm:$0xff]
        %v219 = vld [vmem:[#allocation5 + $0x8] sm:$0xff]
        %v220 = vld [vmem:[#allocation5 + $0x10] sm:$0xff]
        %v221 = vld [vmem:[#allocation5 + $0x18] sm:$0xff]
        %v222 = vld [vmem:[#allocation5 + $0x20] sm:$0xff]
        %v223 = vld [vmem:[#allocation5 + $0x28] sm:$0xff]
        %v224 = vld [vmem:[#allocation5 + $0x30] sm:$0xff]
        %v225 = vld [vmem:[#allocation5 + $0x38] sm:$0xff]
        %v226 = vld [vmem:[#allocation5 + $0x40] sm:$0xff]
        %v227 = vld [vmem:[#allocation5 + $0x48] sm:$0xff]
        %v228 = vld [vmem:[#allocation5 + $0x50] sm:$0xff]
        %v229 = vld [vmem:[#allocation5 + $0x58] sm:$0xff]
        %v230 = vld [vmem:[#allocation5 + $0x60] sm:$0xff]
        %v231 = vld [vmem:[#allocation5 + $0x68] sm:$0xff]
        %v232 = vld [vmem:[#allocation5 + $0x70] sm:$0xff]
        %v233 = vld [vmem:[#allocation5 + $0x78] sm:$0xff]
        %v234 = vld [vmem:[%s2] sm:$0x1]
        %v236 = vperm.slane %v234, 0
        %238 = vmatpush.msra.mxu0 %v233
        %239 = vmatpush.msra.mxu0 %v232
        %240 = vmatpush.msra.mxu0 %v231
        %241 = vmatpush.msra.mxu0 %v230
        %242 = vmatpush.msra.mxu0 %v229
        %243 = vmatpush.msra.mxu0 %v228
        %244 = vmatpush.msra.mxu0 %v227
        %245 = vmatpush.msra.mxu0 %v226
        %246 = vmatpush.msra.mxu0 %v225
        %247 = vmatpush.msra.mxu0 %v224
        %248 = vmatpush.msra.mxu0 %v223
        %249 = vmatpush.msra.mxu0 %v222
        %250 = vmatpush.msra.mxu0 %v221
        %251 = vmatpush.msra.mxu0 %v220
        %252 = vmatpush.msra.mxu0 %v219
        %253 = vmatpush.msra.mxu0 %v218
        %254 = vmatmul.f32.gmra.mxu0 %v210
        %v255 = vpop.f32.mrf.mxu0
        %v256 = vadd.f32 %v236, %v255
        %257 = vmatmul.f32.gmra.mxu0 %v211
        %v258 = vpop.f32.mrf.mxu0
        %v259 = vadd.f32 %v236, %v258
        %260 = vmatmul.f32.gmra.mxu0 %v212
        %v261 = vpop.f32.mrf.mxu0
        %v262 = vadd.f32 %v236, %v261
        %263 = vmatmul.f32.gmra.mxu0 %v213
        %v264 = vpop.f32.mrf.mxu0
        %v265 = vadd.f32 %v236, %v264
        %266 = vmatmul.f32.gmra.mxu0 %v214
        %v267 = vpop.f32.mrf.mxu0
        %v268 = vadd.f32 %v236, %v267
        %269 = vmatmul.f32.gmra.mxu0 %v215
        %v270 = vpop.f32.mrf.mxu0
        %v271 = vadd.f32 %v236, %v270
        %272 = vmatmul.f32.gmra.mxu0 %v216
        %v273 = vpop.f32.mrf.mxu0
        %v274 = vadd.f32 %v236, %v273
        %275 = vmatmul.f32.gmra.mxu0 %v217
        %v276 = vpop.f32.mrf.mxu0
        %v277 = vadd.f32 %v236, %v276
        %278 = vdwg.mxu0
        %v279 = vpack.c.bf16 %v256, %v256
        %v280 = vpack.c.bf16 %v259, %v259
        %v281 = vpack.c.bf16 %v262, %v262
        %v282 = vpack.c.bf16 %v265, %v265
        %v283 = vpack.c.bf16 %v268, %v268
        %v284 = vpack.c.bf16 %v271, %v271
        %v285 = vpack.c.bf16 %v274, %v274
        %v286 = vpack.c.bf16 %v277, %v277
        %287 = vst [vmem:[%s207] sm:$0xf] %v279
        %288 = vst [vmem:[%s207 + $0x4] sm:$0xf] %v280
        %289 = vst [vmem:[%s207 + $0x8] sm:$0xf] %v281
        %290 = vst [vmem:[%s207 + $0xc] sm:$0xf] %v282
        %291 = vst [vmem:[%s207 + $0x10] sm:$0xf] %v283
        %292 = vst [vmem:[%s207 + $0x14] sm:$0xf] %v284
        %293 = vst [vmem:[%s207 + $0x18] sm:$0xf] %v285
        %294 = vst [vmem:[%s207 + $0x1c] sm:$0xf] %v286
        %s295 = sand.u32 %s97, 1
        %s296 = scalar_lea.sflag [#allocation4], %s295
        %s297 = sand.u32 %s97, 1
        %s298 = smul.addr %s297, 32
        %s299 = scalar_lea.vmem [#allocation7], %s298
        // Predicated region
        $region41: #{tpu_custom_call.1} parent=31 // pred_check
          %p300 = pneg %p107
        $region42: #{tpu_custom_call.1} parent=31 // pred_check_branch
          %302 = sbr.rel (%p300) target = $region44
        $region43: #{tpu_custom_call.1} parent=31 // pred_region
          %s303 = smul.u32 8, %s21
          %305 = vsyncadd %s296, 0
          %s306 = smul.addr %s303, 4
          %s307 = scalar_lea.hbm %s3, %s306
          %s308 = sshll.u32 %s299, 4
          %s309 = int_to_ptr.vmem [resolvable:$true] %s308
          %s310 = sshll.u32 %s307, 4
          %s311 = int_to_ptr.hbm [resolvable:$true] %s310
          %316 = dma.vmem_to_hbm [thread:$0]  %s309, 512, %s311, %s296, 64, 64, 4
        $region44: #{tpu_custom_call.1} parent=31 // pred_fallthru
          _
      $region32: #{tpu_custom_call.1} parent=5 // pred_fallthru
        _
      %p317 = scmp.le.s32.totalorder 2, %s16
      // Predicated region
      $region45: #{tpu_custom_call.1} parent=5 // pred_check
        %p318 = pneg %p317
      $region46: #{tpu_custom_call.1} parent=5 // pred_check_branch
        %320 = sbr.rel (%p318) target = $region48
      $region47: #{tpu_custom_call.1} parent=5 // pred_region
        %s321 = ssub.s32 %s16, 2
        // Predicated region
        $region49: #{tpu_custom_call.1} parent=47 // pred_check
          %p322 = pneg %p113
        $region50: #{tpu_custom_call.1} parent=47 // pred_check_branch
          %324 = sbr.rel (%p322) target = $region52
        $region51: #{tpu_custom_call.1} parent=47 // pred_region
          %s325 = sand.u32 %s98, 1
          %s326 = scalar_lea.sflag [#allocation4], %s325
          %s327 = sand.u32 %s98, 1
          %s328 = smul.addr %s327, 32
          %s329 = scalar_lea.vmem [#allocation7], %s328
          %331 = dma.done %s326, 512
        $region52: #{tpu_custom_call.1} parent=47 // pred_fallthru
          _
      $region48: #{tpu_custom_call.1} parent=5 // pred_fallthru
        _
    $region6: #{tpu_custom_call.1} parent=1 // loop_footer
      %s20 = sadd.s32 1, %s16
    $region7: #{tpu_custom_call.1} parent=1 // loop_footer_branch
      %15 = sbr.rel target = $region3
    $region8: #{tpu_custom_call.1} parent=1 // loop_exit
      _
    %332 = vsyncpa [#allocation3], 1
    %s333 = scalar_lea.sflag [#allocation3], 1
    %334 = vsyncpa %s333, 1
    %335 = vsyncpa [#allocation6], 1
    %336 = vsyncpa [#allocation4], 1
    %s337 = scalar_lea.sflag [#allocation4], 1
    %338 = vsyncpa %s337, 1

</llo_original>
